<compile_context>
chip_gen: v7x
topology: tpu7x:2x2x1
jax: 0.10.0
libtpu: 0.0.40
codegen_flags: <defaults>
</compile_context>

<pallas_src>
import functools

import jax
import jax.numpy as jnp
import numpy as np
from jax.experimental import pallas as pl
from jax.experimental.pallas import tpu as pltpu


def _round_up(x, m):
    return ((x + m - 1) // m) * m


def _wing_loss_kernel(hm_ref, tgt_ref, xi_ref, yi_ref, out_ref, *,
                      tile_bj, total_rows, inv_w, inv_h,
                      wing_w, inv_curvature, C):
    # hm_ref : (TILE_BJ, H*W) native dtype, VMEM
    # tgt_ref: (TILE_BJ, 2)   float32,      VMEM
    # xi_ref : (1, H*W)       float32,      VMEM  (flat-index % W)
    # yi_ref : (1, H*W)       float32,      VMEM  (flat-index // W)
    # out_ref: (1, 1)         float32,      SMEM  (this tile's partial sum)
    pid = pl.program_id(0)

    hm = hm_ref[...].astype(jnp.float32)

    # Unnormalized softmax numerator (max-subtracted for stability).
    m = jnp.max(hm, axis=1, keepdims=True)
    e = jnp.exp(hm - m)

    xi = xi_ref[...]            # (1, HW) broadcasts over rows
    yi = yi_ref[...]

    s = jnp.sum(e, axis=1, keepdims=True)          # (T, 1)
    sx = jnp.sum(e * xi, axis=1, keepdims=True)    # (T, 1)
    sy = jnp.sum(e * yi, axis=1, keepdims=True)    # (T, 1)

    inv_s = 1.0 / s                                # row-level divide only
    px = sx * inv_s * inv_w
    py = sy * inv_s * inv_h

    tx = tgt_ref[:, 0:1] * inv_w
    ty = tgt_ref[:, 1:2] * inv_h

    dx = jnp.abs(tx - px)
    dy = jnp.abs(ty - py)

    def wing(d):
        return jnp.where(d < wing_w,
                         wing_w * jnp.log(1.0 + d * inv_curvature),
                         d - C)

    # Mask rows that are only padding (BJ rounded up to TILE_BJ).
    row = jax.lax.broadcasted_iota(jnp.int32, (tile_bj, 1), 0) + pid * tile_bj
    valid = (row < total_rows).astype(jnp.float32)

    out_ref[0, 0] = jnp.sum((wing(dx) + wing(dy)) * valid)


def wing_loss(output, target, target_weight=None, *,
              width=5.0, curvature=0.5, image_size=(384, 288),
              tile_bj=128):
    """output: (B, J, H, W) heatmaps (any float dtype); target: (B, J, 2)."""
    B, J, H, W = output.shape
    BJ = B * J
    HW = H * W
    C = width - width * float(np.log(1.0 + width / curvature))

    # Tile the row axis; keep the sublane dim a multiple of 8 (16-friendly
    # for bf16 inputs too, since 128 % 16 == 0).
    tile_bj = max(8, _round_up(min(tile_bj, _round_up(BJ, 8)), 8))
    num_tiles = pl.cdiv(BJ, tile_bj)
    BJ_pad = num_tiles * tile_bj

    # Keep native dtype for the heatmaps (no wrapper-side f32 copy).
    hm_flat = output.reshape(BJ, HW)
    tgt_flat = target.reshape(BJ, 2).astype(jnp.float32)
    if BJ_pad != BJ:
        hm_flat = jnp.pad(hm_flat, ((0, BJ_pad - BJ), (0, 0)))
        tgt_flat = jnp.pad(tgt_flat, ((0, BJ_pad - BJ), (0, 0)))

    # Precomputed coordinate rows: flat index -> (x = i % W, y = i // W).
    flat = np.arange(HW)
    xi = jnp.asarray((flat % W).astype(np.float32)).reshape(1, HW)
    yi = jnp.asarray((flat // W).astype(np.float32)).reshape(1, HW)

    kernel = functools.partial(
        _wing_loss_kernel,
        tile_bj=tile_bj, total_rows=BJ,
        inv_w=1.0 / float(image_size[1]), inv_h=1.0 / float(image_size[0]),
        wing_w=float(width), inv_curvature=1.0 / float(curvature), C=C,
    )

    hm_bytes = hm_flat.size * hm_flat.dtype.itemsize
    cost = pl.CostEstimate(
        flops=7 * BJ * HW,
        transcendentals=BJ * HW,
        bytes_accessed=hm_bytes + tgt_flat.size * 4 + 2 * HW * 4 + num_tiles * 4,
    )

    partials = pl.pallas_call(
        kernel,
        out_shape=jax.ShapeDtypeStruct((num_tiles, 1), jnp.float32),
        grid=(num_tiles,),
        in_specs=[
            pl.BlockSpec((tile_bj, HW), lambda i: (i, 0)),
            pl.BlockSpec((tile_bj, 2), lambda i: (i, 0)),
            pl.BlockSpec((1, HW), lambda i: (0, 0)),
            pl.BlockSpec((1, HW), lambda i: (0, 0)),
        ],
        out_specs=pl.BlockSpec((1, 1), lambda i: (i, 0),
                               memory_space=pltpu.SMEM),
        compiler_params=pltpu.CompilerParams(
            dimension_semantics=("parallel",),
            vmem_limit_bytes=32 * 1024 * 1024,
        ),
        cost_estimate=cost,
    )(hm_flat, tgt_flat, xi, yi)

    # Global mean over B*J*2 coordinate entries (not per-tile counts).
    return jnp.sum(partials) / jnp.float32(BJ * 2)


def _reference(output, target, *, width=5.0, curvature=0.5,
               image_size=(384, 288)):
    # Plain-JAX mirror of the PyTorch forward (sanity check only).
    B, J, H, W = output.shape
    C = width - width * float(np.log(1.0 + width / curvature))
    hm = output.reshape(B, J, H * W).astype(jnp.float32)
    p = jax.nn.softmax(hm, axis=2).reshape(B, J, H, W)
    x = (p.sum(axis=2) * jnp.arange(W, dtype=jnp.float32)[None, None, :]).sum(axis=2)
    y = (p.sum(axis=3) * jnp.arange(H, dtype=jnp.float32)[None, None, :]).sum(axis=2)
    px = x / image_size[1]
    py = y / image_size[0]
    tx = target[:, :, 0] / image_size[1]
    ty = target[:, :, 1] / image_size[0]
    d = jnp.abs(jnp.stack([tx - px, ty - py], axis=-1))
    loss = jnp.where(d < width, width * jnp.log(1.0 + d / curvature), d - C)
    return loss.mean()


if __name__ == "__main__":
    key = jax.random.PRNGKey(0)
    k1, k2, _ = jax.random.split(key, 3)

    B, J, H, W = 2, 4, 16, 16
    output = jax.random.normal(k1, (B, J, H, W), dtype=jnp.float32) * 3.0
    # Target joint coordinates in pixel units, within the heatmap range.
    target = jax.random.uniform(k2, (B, J, 2), dtype=jnp.float32,
                                minval=0.0, maxval=float(W - 1))
    target_weight = jnp.ones((B, J, 1), dtype=jnp.float32)  # unused in forward

    loss = jax.block_until_ready(wing_loss(output, target, target_weight))
    ref = jax.block_until_ready(_reference(output, target))
    assert np.allclose(np.asarray(loss), np.asarray(ref),
                       rtol=1e-5, atol=1e-5), (loss, ref)

    print("KERNEL_OK")
</pallas_src>

<mosaic_0001>
module attributes {stable_mosaic.version = 11 : i64} {
  func.func @_wing_loss_kernel(%arg0: i32, %arg1: memref<8x256xf32, #tpu.memory_space<vmem>>, %arg2: memref<8x2xf32, #tpu.memory_space<vmem>>, %arg3: memref<1x256xf32, #tpu.memory_space<vmem>>, %arg4: memref<1x256xf32, #tpu.memory_space<vmem>>, %arg5: memref<1x1xf32, #tpu.memory_space<smem>>) attributes {dimension_semantics = [#tpu.dimension_semantics<parallel>], iteration_bounds = array<i64: 1>, scalar_prefetch = 0 : i64, scratch_operands = 0 : i64, tpu.core_type = #tpu.core_type<tc>, window_params = [{transform_indices = @transform_0, window_bounds = array<i64: 8, 256>}, {transform_indices = @transform_1, window_bounds = array<i64: 8, 2>}, {pipeline_mode = #tpu.pipeline_mode<synchronous>, transform_indices = @transform_2, window_bounds = array<i64: 1, 256>}, {pipeline_mode = #tpu.pipeline_mode<synchronous>, transform_indices = @transform_3, window_bounds = array<i64: 1, 256>}, {transform_indices = @transform_4, window_bounds = array<i64: 1, 1>}]} {
    %c0 = arith.constant 0 : index
    %c0_0 = arith.constant 0 : index
    %0 = vector.load %arg1[%c0, %c0_0] : memref<8x256xf32, #tpu.memory_space<vmem>>, vector<8x256xf32>
    %cst = arith.constant dense<0xFF800000> : vector<8xf32>
    %1 = vector.multi_reduction <maximumf>, %0, %cst [1] : vector<8x256xf32> to vector<8xf32>
    %2 = vector.shape_cast %1 : vector<8xf32> to vector<8x1xf32>
    %3 = vector.broadcast %2 : vector<8x1xf32> to vector<8x256xf32>
    %4 = arith.subf %0, %3 : vector<8x256xf32>
    %5 = math.exp %4 : vector<8x256xf32>
    %c0_1 = arith.constant 0 : index
    %c0_2 = arith.constant 0 : index
    %6 = vector.load %arg3[%c0_1, %c0_2] : memref<1x256xf32, #tpu.memory_space<vmem>>, vector<1x256xf32>
    %c0_3 = arith.constant 0 : index
    %c0_4 = arith.constant 0 : index
    %7 = vector.load %arg4[%c0_3, %c0_4] : memref<1x256xf32, #tpu.memory_space<vmem>>, vector<1x256xf32>
    %cst_5 = arith.constant dense<0.000000e+00> : vector<8xf32>
    %8 = vector.multi_reduction <add>, %5, %cst_5 [1] : vector<8x256xf32> to vector<8xf32>
    %9 = vector.shape_cast %8 : vector<8xf32> to vector<8x1xf32>
    %10 = vector.broadcast %6 : vector<1x256xf32> to vector<8x256xf32>
    %11 = arith.mulf %5, %10 : vector<8x256xf32>
    %cst_6 = arith.constant dense<0.000000e+00> : vector<8xf32>
    %12 = vector.multi_reduction <add>, %11, %cst_6 [1] : vector<8x256xf32> to vector<8xf32>
    %13 = vector.shape_cast %12 : vector<8xf32> to vector<8x1xf32>
    %14 = vector.broadcast %7 : vector<1x256xf32> to vector<8x256xf32>
    %15 = arith.mulf %5, %14 : vector<8x256xf32>
    %cst_7 = arith.constant dense<0.000000e+00> : vector<8xf32>
    %16 = vector.multi_reduction <add>, %15, %cst_7 [1] : vector<8x256xf32> to vector<8xf32>
    %17 = vector.shape_cast %16 : vector<8xf32> to vector<8x1xf32>
    %cst_8 = arith.constant 1.000000e+00 : f32
    %18 = vector.broadcast %cst_8 : f32 to vector<8x1xf32>
    %19 = arith.divf %18, %9 : vector<8x1xf32>
    %20 = arith.mulf %13, %19 : vector<8x1xf32>
    %cst_9 = arith.constant 0.00347222225 : f32
    %21 = vector.broadcast %cst_9 : f32 to vector<8x1xf32>
    %22 = arith.mulf %20, %21 : vector<8x1xf32>
    %23 = arith.mulf %17, %19 : vector<8x1xf32>
    %cst_10 = arith.constant 0.00260416674 : f32
    %24 = vector.broadcast %cst_10 : f32 to vector<8x1xf32>
    %25 = arith.mulf %23, %24 : vector<8x1xf32>
    %c0_11 = arith.constant 0 : index
    %c0_12 = arith.constant 0 : index
    %26 = vector.load %arg2[%c0_11, %c0_12] : memref<8x2xf32, #tpu.memory_space<vmem>>, vector<8x1xf32>
    %cst_13 = arith.constant 0.00347222225 : f32
    %27 = vector.broadcast %cst_13 : f32 to vector<8x1xf32>
    %28 = arith.mulf %26, %27 : vector<8x1xf32>
    %c0_14 = arith.constant 0 : index
    %c1 = arith.constant 1 : index
    %29 = vector.load %arg2[%c0_14, %c1] : memref<8x2xf32, #tpu.memory_space<vmem>>, vector<8x1xf32>
    %cst_15 = arith.constant 0.00260416674 : f32
    %30 = vector.broadcast %cst_15 : f32 to vector<8x1xf32>
    %31 = arith.mulf %29, %30 : vector<8x1xf32>
    %32 = arith.subf %28, %22 : vector<8x1xf32>
    %33 = math.absf %32 : vector<8x1xf32>
    %34 = arith.subf %31, %25 : vector<8x1xf32>
    %35 = math.absf %34 : vector<8x1xf32>
    %36 = tpu.iota {dimensions = array<i32: 0>} : vector<8x1xi32>
    %c8_i32 = arith.constant 8 : i32
    %37 = arith.muli %arg0, %c8_i32 : i32
    %38 = vector.broadcast %37 : i32 to vector<8x1xi32>
    %39 = arith.addi %36, %38 : vector<8x1xi32>
    %c8_i32_16 = arith.constant 8 : i32
    %40 = vector.broadcast %c8_i32_16 : i32 to vector<8x1xi32>
    %41 = arith.cmpi slt, %39, %40 : vector<8x1xi32>
    %42 = arith.extui %41 : vector<8x1xi1> to vector<8x1xi32>
    %43 = arith.sitofp %42 : vector<8x1xi32> to vector<8x1xf32>
    %cst_17 = arith.constant 5.000000e+00 : f32
    %44 = vector.broadcast %cst_17 : f32 to vector<8x1xf32>
    %45 = arith.cmpf olt, %33, %44 : vector<8x1xf32>
    %cst_18 = arith.constant 2.000000e+00 : f32
    %46 = vector.broadcast %cst_18 : f32 to vector<8x1xf32>
    %47 = arith.mulf %33, %46 : vector<8x1xf32>
    %cst_19 = arith.constant 1.000000e+00 : f32
    %48 = vector.broadcast %cst_19 : f32 to vector<8x1xf32>
    %49 = arith.addf %48, %47 : vector<8x1xf32>
    %50 = math.log %49 : vector<8x1xf32>
    %cst_20 = arith.constant 5.000000e+00 : f32
    %51 = vector.broadcast %cst_20 : f32 to vector<8x1xf32>
    %52 = arith.mulf %51, %50 : vector<8x1xf32>
    %cst_21 = arith.constant -6.9894762 : f32
    %53 = vector.broadcast %cst_21 : f32 to vector<8x1xf32>
    %54 = arith.subf %33, %53 : vector<8x1xf32>
    %55 = arith.select %45, %52, %54 : vector<8x1xi1>, vector<8x1xf32>
    %cst_22 = arith.constant 5.000000e+00 : f32
    %56 = vector.broadcast %cst_22 : f32 to vector<8x1xf32>
    %57 = arith.cmpf olt, %35, %56 : vector<8x1xf32>
    %cst_23 = arith.constant 2.000000e+00 : f32
    %58 = vector.broadcast %cst_23 : f32 to vector<8x1xf32>
    %59 = arith.mulf %35, %58 : vector<8x1xf32>
    %cst_24 = arith.constant 1.000000e+00 : f32
    %60 = vector.broadcast %cst_24 : f32 to vector<8x1xf32>
    %61 = arith.addf %60, %59 : vector<8x1xf32>
    %62 = math.log %61 : vector<8x1xf32>
    %cst_25 = arith.constant 5.000000e+00 : f32
    %63 = vector.broadcast %cst_25 : f32 to vector<8x1xf32>
    %64 = arith.mulf %63, %62 : vector<8x1xf32>
    %cst_26 = arith.constant -6.9894762 : f32
    %65 = vector.broadcast %cst_26 : f32 to vector<8x1xf32>
    %66 = arith.subf %35, %65 : vector<8x1xf32>
    %67 = arith.select %57, %64, %66 : vector<8x1xi1>, vector<8x1xf32>
    %68 = arith.addf %55, %67 : vector<8x1xf32>
    %69 = arith.mulf %68, %43 : vector<8x1xf32>
    %70 = vector.shape_cast %69 : vector<8x1xf32> to vector<1x8x1xf32>
    %cst_27 = arith.constant dense<0.000000e+00> : vector<1xf32>
    %71 = vector.multi_reduction <add>, %70, %cst_27 [1, 2] : vector<1x8x1xf32> to vector<1xf32>
    %72 = vector.shape_cast %71 : vector<1xf32> to vector<1x1x1xf32>
    %73 = vector.extract %72[0, 0, 0] : f32 from vector<1x1x1xf32>
    %c0_28 = arith.constant 0 : index
    %c0_29 = arith.constant 0 : index
    %74 = memref.load %arg5[%c0_28, %c0_29] : memref<1x1xf32, #tpu.memory_space<smem>>
    memref.store %73, %arg5[%c0_28, %c0_29] : memref<1x1xf32, #tpu.memory_space<smem>>
    return
  }
  func.func @transform_0(%arg0: i32) -> (i32, i32) {
    %c0_i32 = arith.constant 0 : i32
    %c0_i32_0 = arith.constant 0 : i32
    return %arg0, %c0_i32 : i32, i32
  }
  func.func @transform_1(%arg0: i32) -> (i32, i32) {
    %c0_i32 = arith.constant 0 : i32
    %c0_i32_0 = arith.constant 0 : i32
    return %arg0, %c0_i32 : i32, i32
  }
  func.func @transform_2(%arg0: i32) -> (i32, i32) {
    %c0_i32 = arith.constant 0 : i32
    %c0_i32_0 = arith.constant 0 : i32
    %c0_i32_1 = arith.constant 0 : i32
    return %c0_i32, %c0_i32_0 : i32, i32
  }
  func.func @transform_3(%arg0: i32) -> (i32, i32) {
    %c0_i32 = arith.constant 0 : i32
    %c0_i32_0 = arith.constant 0 : i32
    %c0_i32_1 = arith.constant 0 : i32
    return %c0_i32, %c0_i32_0 : i32, i32
  }
  func.func @transform_4(%arg0: i32) -> (i32, i32) {
    %c0_i32 = arith.constant 0 : i32
    %c0_i32_0 = arith.constant 0 : i32
    return %arg0, %c0_i32 : i32, i32
  }
}

</mosaic_0001>

<llo_original>
// kernel: tpu_custom_call.1
$region0: #{tpu_custom_call.1}
  #allocation0 [shape = 'u32[]', space=smem, size = 0x4, offset = 0x4, fixed_abs, tag = 'smem constant byte address 0x4 - core index']
  #allocation1 [shape = 'u32[144,128]{1,0:T(1,128)}', space=vmem, size = 0x12000, scoped, tag = 'internal scratch']
  %s0 = inlined_call_operand.hbm [shape: f32[8,256], index: 0, kind: input, shape index: {}]
  %s1 = inlined_call_operand.vmem [shape: f32[8,2], index: 1, kind: input, shape index: {}]
  %s2 = inlined_call_operand.vmem [shape: f32[1,256], index: 2, kind: input, shape index: {}]
  %s3 = inlined_call_operand.vmem [shape: f32[1,256], index: 3, kind: input, shape index: {}]
  %s4 = inlined_call_operand.hbm [shape: f32[1,1], index: 4, kind: output, shape index: {}]
  %s5 = sld [smem:[#allocation0]]
  $region30: #{tpu_custom_call.1} parent=0
    _
  %s7 = ssub.s32 1, %s5
  %s8 = scalar_select 0, %s7, %s5
  $region1: #{tpu_custom_call.1} parent=0
    #allocation2 [shape = 'u8[8192]{0}', space=vmem, size = 0x2000, scoped, tag = 'input window, operand 0, single buffered']
    #allocation3 [shape = 's32[1]{0}', space=sflag, size = 0x4, scoped, tag = 'scoped memory for tpu_custom_call.1']
    #allocation4 [shape = 's32[1]{0}', space=sflag, size = 0x4, scoped, tag = 'scoped memory for tpu_custom_call.1']
    #allocation5 [shape = 'u8[512]{0}', space=smem, size = 0x200, scoped, tag = 'output window, operand 0, single buffered']
    %9 = vsyncpa [#allocation3], 0
    %10 = vsyncpa [#allocation4], 0
    // Predicated region
    $region2: #{tpu_custom_call.1} parent=1 // pred_check
      _
    $region3: #{tpu_custom_call.1} parent=1 // pred_check_branch
      %12 = sbr.rel (0) target = $region5
    $region4: #{tpu_custom_call.1} parent=1 // pred_region
      %s14 = ssub.s32 256, 256
      %15 = vsyncadd [#allocation3], %s14
      %s17 = sshll.u32 [#allocation2], 4
      %s18 = int_to_ptr.vmem [resolvable:$true] %s17
      %20 = dma.hbm_to_vmem [thread:$0]  %s0, 256, %s18, [#allocation3]
    $region5: #{tpu_custom_call.1} parent=1 // pred_fallthru
      _
    // Predicated region
    $region6: #{tpu_custom_call.1} parent=1 // pred_check
      _
    $region7: #{tpu_custom_call.1} parent=1 // pred_check_branch
      %22 = sbr.rel (0) target = $region9
    $region8: #{tpu_custom_call.1} parent=1 // pred_region
      _
    $region9: #{tpu_custom_call.1} parent=1 // pred_fallthru
      _
    // Predicated region
    $region10: #{tpu_custom_call.1} parent=1 // pred_check
      _
    $region11: #{tpu_custom_call.1} parent=1 // pred_check_branch
      %24 = sbr.rel (0) target = $region13
    $region12: #{tpu_custom_call.1} parent=1 // pred_region
      _
    $region13: #{tpu_custom_call.1} parent=1 // pred_fallthru
      _
    // Predicated region
    $region14: #{tpu_custom_call.1} parent=1 // pred_check
      _
    $region15: #{tpu_custom_call.1} parent=1 // pred_check_branch
      %26 = sbr.rel (0) target = $region17
    $region16: #{tpu_custom_call.1} parent=1 // pred_region
      _
    $region17: #{tpu_custom_call.1} parent=1 // pred_fallthru
      _
    // Predicated region
    $region18: #{tpu_custom_call.1} parent=1 // pred_check
      _
    $region19: #{tpu_custom_call.1} parent=1 // pred_check_branch
      %28 = sbr.rel (0) target = $region21
    $region20: #{tpu_custom_call.1} parent=1 // pred_region
      %29 = dma.done [#allocation3], 256
    $region21: #{tpu_custom_call.1} parent=1 // pred_fallthru
      _
    %v30 = vld [vmem:[#allocation2] sm:$0xff]
    %v31 = vld [vmem:[#allocation2 + $0x8] sm:$0xff]
    %v32 = vmax.f32 %v30, %v31
    %33 = vmax.xlane.f32.xlu0 %v32
    %v34 = vpop.xlane.xlu0 %33
    %v35 = vsub.f32 %v30, %v34
    %v36 = vsub.f32 %v31, %v34
    %v37 = vmul.f32 %v35, 1.442695
    %v38 = vpow.pop %v37
    %v39 = vmul.f32 %v36, 1.442695
    %v40 = vpow.pop %v39
    %v41 = vld [vmem:[%s2] sm:$0x3]
    %v42 = vld [vmem:[%s3] sm:$0x3]
    %v43 = vadd.f32 %v38, %v40
    %44 = vadd.xlane.f32.xlu0 %v43
    %v45 = vpop.xlane.xlu0 %44
    %v47 = vlaneseq
    %v48 = vshrl.u32 %v47, 7
    %v49 = vsub.s32 0, %v48
    %v50 = vrot.slane %v41, %v49
    %v51 = vlaneseq
    %v52 = vshrl.u32 %v51, 7
    %v53 = vsub.s32 1, %v52
    %v54 = vrot.slane %v41, %v53
    %v57 = vmul.f32 %v38, %v50
    %v58 = vmul.f32 %v40, %v54
    %v59 = vadd.f32 %v57, %v58
    %60 = vadd.xlane.f32.xlu0 %v59
    %v61 = vpop.xlane.xlu0 %60
    %v63 = vlaneseq
    %v64 = vshrl.u32 %v63, 7
    %v65 = vsub.s32 0, %v64
    %v66 = vrot.slane %v42, %v65
    %v67 = vlaneseq
    %v68 = vshrl.u32 %v67, 7
    %v69 = vsub.s32 1, %v68
    %v70 = vrot.slane %v42, %v69
    %v73 = vmul.f32 %v38, %v66
    %v74 = vmul.f32 %v40, %v70
    %v75 = vadd.f32 %v73, %v74
    %76 = vadd.xlane.f32.xlu0 %v75
    %v77 = vpop.xlane.xlu0 %76
    %v78 = vrcp.pop %v45
    %v79 = vmul.f32 1.0, %v78
    %v80 = vmul.f32 %v61, %v79
    %v81 = vmul.f32 %v80, 0.0034722222
    %v82 = vmul.f32 %v77, %v79
    %v83 = vmul.f32 %v82, 0.0026041667
    %v84 = vld [vmem:[%s1] sm:$0xff]
    %v85 = vmul.f32 %v84, 0.0034722222
    %v86 = vmul.f32 %v84, 0.0026041667
    %v87 = vsub.f32 %v85, %v81
    %v88 = vand.u32 2147483647, %v87
    %v89 = vsub.f32 %v86, %v83
    %v90 = vand.u32 2147483647, %v89
    %v91 = vlaneseq
    %v92 = vshrl.u32 %v91, 7
    %s93 = smul.u32 0, 8
    %v94 = vstv %s93
    %v95 = vadd.s32 %v92, %v94
    %vm96 = vcmp.lt.s32.totalorder %v95, 8
    %v97 = vsel %vm96, 1, 0
    %v98 = vcvt.s32.f32 %v97
    %vm99 = vcmp.lt.f32.partialorder %v88, 5.0
    %v100 = vmul.f32 %v88, 2.0
    %v101 = vadd.f32 %v100, 1.0
    %v102 = vlog2.pop %v101
    %v103 = vmul.f32 %v102, 0.6931472
    %v104 = vmul.f32 %v103, 5.0
    %v105 = vsub.f32 %v88, -6.989476
    %v106 = vsel %vm99, %v104, %v105
    %vm107 = vcmp.lt.f32.partialorder %v90, 5.0
    %v108 = vmul.f32 %v90, 2.0
    %v109 = vadd.f32 %v108, 1.0
    %v110 = vlog2.pop %v109
    %v111 = vmul.f32 %v110, 0.6931472
    %v112 = vmul.f32 %v111, 5.0
    %v113 = vsub.f32 %v90, -6.989476
    %v114 = vsel %vm107, %v112, %v113
    %116 = vrot.lane.b32.xlu0 %v114, 127
    %v117 = vpop.permute.xlu0 %116
    %v119 = vadd.f32 %v106, %v117
    %v120 = vmul.f32 %v119, %v98
    %vm121 = vcmask 7168
    %v122 = vsel %vm121, %v120, 0.0
    %123 = vadd.xlane.f32.xlu0 %v122
    %v124 = vpop.xlane.xlu0 %123
    %v125 = vrot.slane %v124, 4
    %v126 = vadd.f32 %v124, %v125
    %v127 = vrot.slane %v126, 2
    %v128 = vadd.f32 %v126, %v127
    %v129 = vrot.slane %v128, 1
    %v130 = vadd.f32 %v128, %v129
    %s131 = vtos %v130
    %s132 = scalar_lea.smem [#allocation5], 0
    %133 = sst [smem:[%s132]] %s131
    // Predicated region
    $region22: #{tpu_custom_call.1} parent=1 // pred_check
      _
    $region23: #{tpu_custom_call.1} parent=1 // pred_check_branch
      %135 = sbr.rel (0) target = $region25
    $region24: #{tpu_custom_call.1} parent=1 // pred_region
      %s137 = ssub.s32 16, 16
      %138 = vsyncadd [#allocation4], %s137
      %141 = dma.smem_to_hbm [#allocation5], 16, %s4, [#allocation4]
    $region25: #{tpu_custom_call.1} parent=1 // pred_fallthru
      _
    // Predicated region
    $region26: #{tpu_custom_call.1} parent=1 // pred_check
      _
    $region27: #{tpu_custom_call.1} parent=1 // pred_check_branch
      %143 = sbr.rel (0) target = $region29
    $region28: #{tpu_custom_call.1} parent=1 // pred_region
      %144 = dma.done [#allocation4], 16
    $region29: #{tpu_custom_call.1} parent=1 // pred_fallthru
      _
    %145 = sfence
    %146 = vsyncpa [#allocation3], 1
    %147 = vsyncpa [#allocation4], 1

</llo_original>
